<compile_context>
chip_gen: v5e
topology: v5e:2x2
jax: 0.10.0
libtpu: 0.0.40
codegen_flags: <defaults>
</compile_context>

<pallas_src>
import math

import jax
import jax.numpy as jnp
from jax.experimental import pallas as pl
from jax.experimental.pallas import tpu as pltpu

NC_PAD = 128  # class axis padded to one full 128-lane group


def _round_up(v, m):
    return -(-v // m) * m


def _invariant_pipeline_mode():
    """Single-buffer mode for grid-invariant operands, if this Pallas supports it."""
    if not hasattr(pl, "Buffered"):
        return None
    try:
        mode = pl.Buffered(1)
        pl.BlockSpec((8, 128), lambda i, j: (0, 0), pipeline_mode=mode)
        return mode
    except Exception:
        return None


_INVARIANT_MODE = _invariant_pipeline_mode()


def _invariant_spec(shape):
    """BlockSpec for an operand whose block never changes across the grid."""
    if _INVARIANT_MODE is not None:
        return pl.BlockSpec(shape, lambda bi, ki: (0, 0),
                            pipeline_mode=_INVARIANT_MODE)
    return pl.BlockSpec(shape, lambda bi, ki: (0, 0))


def _vmem_capacity_bytes():
    """Per-TensorCore VMEM; conservative 64 MiB fallback is valid on every gen."""
    try:
        info = pltpu.get_tpu_info()
        for name in ("vmem_capacity_bytes", "vmem_size_bytes", "vmem_bytes"):
            cap = getattr(info, name, None)
            if cap:
                return int(cap)
    except Exception:
        pass
    return 64 << 20


def _tensorcores_per_chip():
    """2 on megacore chips (v7x / v4 / v5p), else 1; best-effort."""
    try:
        kind = (getattr(jax.devices()[0], "device_kind", "") or "").lower()
        if "v7" in kind or "v4" in kind or "v5p" in kind:
            return 2
    except Exception:
        pass
    return 1


def _vmem_estimate(b_tile, tk, D, inv_bufs):
    """Bytes of VMEM the pipeline needs for one (b_tile, tk) configuration."""
    bf, f32, i32 = 2, 4, 4
    return int(
        2 * b_tile * tk * bf                 # x blocks (double-buffered)
        + 2 * tk * D * bf                    # dense weight blocks (double-buffered)
        + inv_bufs * 3 * D * f32             # bd / gamma / beta
        + inv_bufs * D * (2 * NC_PAD) * bf   # fused decoder weight
        + inv_bufs * NC_PAD * f32            # decoder bias
        + 2 * b_tile * i32                   # idx blocks
        + b_tile * D * f32                   # f32 accumulator scratch
        + 2 * b_tile * NC_PAD * f32)         # output blocks


def _tk_candidates(D, target=1024):
    """K-tile sizes: multiples of 128 dividing D, largest (<= target) first."""
    if D % 128 != 0 or D <= 128:
        return [D]
    cands = [t for t in range(min(target, D), 0, -128) if D % t == 0]
    return cands or [D]


def _pick_tiles(B, D, vmem_cap, n_cores, inv_bufs):
    """Generation-aware (b_tile, tk) choice against the device VMEM budget."""
    budget = int(0.75 * vmem_cap)
    B16 = _round_up(max(B, 1), 16)

    b_cands = []
    if n_cores >= 2 and B16 >= 32:
        # >= 2 batch tiles so dimension_semantics=("parallel", ...) can shard the
        # batch axis across both TensorCores (v7x megacore); no-op on v5e/v6e.
        b_cands.append(min(256, _round_up(pl.cdiv(B16, 2), 16)))
    # Fewest batch tiles with <= 256-row tiles: every extra batch tile re-streams
    # the full (D, D) dense weight from HBM (the dominant traffic), and 256 rows
    # fill the v6e/v7x MXU M dimension.
    even = _round_up(pl.cdiv(B16, pl.cdiv(B16, 256)), 16)
    if even not in b_cands:
        b_cands.append(even)
    for cand in (128, 64, 32, 16):
        if cand < even and cand not in b_cands:
            b_cands.append(cand)

    for b_tile in b_cands:
        for tk in _tk_candidates(D):
            if _vmem_estimate(b_tile, tk, D, inv_bufs) <= budget:
                return b_tile, tk
    return b_cands[-1], _tk_candidates(D)[-1]


def tflinear_kernel(x_ref, wd_ref, bd_ref, gamma_ref, beta_ref,
                    wsel_ref, bsel_ref, idx_ref, out_ref, acc_ref):
    ki = pl.program_id(1)

    @pl.when(ki == 0)
    def _init():
        acc_ref[...] = jnp.zeros_like(acc_ref)

    # dense: accumulate x[:, k-block] @ W[k-block, :] on the MXU (bf16 in, f32 acc)
    acc_ref[...] += jnp.dot(x_ref[...], wd_ref[...],
                            preferred_element_type=jnp.float32)

    @pl.when(ki == pl.num_programs(1) - 1)
    def _finalize():
        h = acc_ref[...] + bd_ref[...]                              # (Bt, D) f32

        # exact (erf) GELU, matching torch.nn.functional.gelu default
        h = 0.5 * h * (1.0 + jax.lax.erf(h * (1.0 / math.sqrt(2.0))))

        # LayerNorm over features, eps=1e-5 (two-pass variance, matches reference)
        mean = jnp.mean(h, axis=-1, keepdims=True)
        hc = h - mean
        var = jnp.mean(hc * hc, axis=-1, keepdims=True)
        h = hc * jax.lax.rsqrt(var + 1e-5)
        h = h * gamma_ref[...] + beta_ref[...]

        # fused IdxSelMLP decoder: one (D, 2*NC_PAD) matmul, then pick the slab
        # per row.  idx in {0, 1} (indexed-select semantics); bias row 0 always
        # (mirrors the PyTorch biases[0][zeros_like(idx)] indexing).
        dec = jnp.dot(h.astype(wsel_ref.dtype), wsel_ref[...],
                      preferred_element_type=jnp.float32)           # (Bt, 2*NC_PAD)
        ncp = out_ref.shape[-1]
        sel0 = idx_ref[...] == 0                                    # (Bt, 1) bool
        out = jnp.where(sel0, dec[:, :ncp], dec[:, ncp:]) + bsel_ref[...]
        out_ref[...] = out.astype(out_ref.dtype)


def init_params(key, emb_size, seq_len, n_classes=2):
    """PyTorch-layout parameters (dense weight stored (out, in))."""
    D = emb_size * seq_len
    k1, k2, k3 = jax.random.split(key, 3)
    wd = jax.random.normal(k1, (D, D), jnp.float32) * (1.0 / math.sqrt(D))
    bd = jax.random.normal(k2, (D,), jnp.float32) * 0.01
    gamma = jnp.ones((D,), jnp.float32)       # LayerNorm defaults
    beta = jnp.zeros((D,), jnp.float32)
    xavier_std = math.sqrt(2.0 / (D + n_classes))
    wsel = jax.random.normal(k3, (2, D, n_classes), jnp.float32) * xavier_std
    bsel = jnp.zeros((2, n_classes), jnp.float32)
    return {"wd": wd, "bd": bd, "gamma": gamma, "beta": beta,
            "wsel": wsel, "bsel": bsel}


def prepare_params(params, n_classes):
    """One-time layout prep (NOT in the per-call path): transpose / pad / bf16."""
    D = params["wd"].shape[0]
    wd_t = jnp.transpose(params["wd"]).astype(jnp.bfloat16)          # (D_in, D_out)
    bd = params["bd"].reshape(1, D).astype(jnp.float32)
    gamma = params["gamma"].reshape(1, D).astype(jnp.float32)
    beta = params["beta"].reshape(1, D).astype(jnp.float32)
    # decoder: concat the 2 slabs along the class axis, each padded to NC_PAD lanes
    wsel_cat = jnp.zeros((D, 2 * NC_PAD), jnp.float32)
    wsel_cat = wsel_cat.at[:, :n_classes].set(params["wsel"][0])
    wsel_cat = wsel_cat.at[:, NC_PAD:NC_PAD + n_classes].set(params["wsel"][1])
    wsel_cat = wsel_cat.astype(jnp.bfloat16)
    # PyTorch code indexes bias with zeros_like(idx) -> always row 0
    bsel_p = jnp.zeros((1, NC_PAD), jnp.float32).at[0, :n_classes].set(params["bsel"][0])
    return {"wd_t": wd_t, "bd": bd, "gamma": gamma, "beta": beta,
            "wsel_cat": wsel_cat, "bsel_p": bsel_p,
            "n_classes": n_classes, "D": D}


def tflinear_forward(x, idx, prepped, *, tk=None, b_tile=None):
    """x: (B, seq, emb) float32; idx: (B,) int32 with values in {0, 1}."""
    B = x.shape[0]
    D = prepped["D"]
    n_classes = prepped["n_classes"]

    inv_bufs = 1 if _INVARIANT_MODE is not None else 2
    vmem_cap = _vmem_capacity_bytes()
    n_cores = _tensorcores_per_chip()
    auto_b, auto_tk = _pick_tiles(B, D, vmem_cap, n_cores, inv_bufs)
    b_tile = auto_b if b_tile is None else b_tile
    tk = auto_tk if tk is None else tk
    assert D % tk == 0 and (tk % 128 == 0 or tk == D), (D, tk)
    assert b_tile % 16 == 0, b_tile

    x2 = x.reshape(B, -1).astype(jnp.bfloat16)                       # (B, D) bf16
    idx1 = idx.astype(jnp.int32).reshape(B)

    B_pad = _round_up(B, b_tile)
    if B_pad != B:
        x2 = jnp.pad(x2, ((0, B_pad - B), (0, 0)))
        idx1 = jnp.pad(idx1, (0, B_pad - B))
    idx2 = idx1.reshape(B_pad, 1)

    nk = D // tk
    nb = B_pad // b_tile

    # VMEM limit from actual block sizes, hard-capped at 85% of the device's
    # physical VMEM (64 MiB/TC on v7x, 128 MiB on v5e/v6e).
    vmem_est = _vmem_estimate(b_tile, tk, D, inv_bufs)
    vmem_limit = int(min(max(2 * vmem_est, 32 << 20), int(0.85 * vmem_cap)))

    grid_spec = pltpu.PrefetchScalarGridSpec(
        num_scalar_prefetch=0,
        grid=(nb, nk),
        in_specs=[
            pl.BlockSpec((b_tile, tk), lambda bi, ki: (bi, ki)),        # x
            pl.BlockSpec((tk, D), lambda bi, ki: (ki, 0)),              # wd_t
            _invariant_spec((1, D)),                                    # bd
            _invariant_spec((1, D)),                                    # gamma
            _invariant_spec((1, D)),                                    # beta
            _invariant_spec((D, 2 * NC_PAD)),                           # wsel_cat
            _invariant_spec((1, NC_PAD)),                               # bsel
            pl.BlockSpec((b_tile, 1), lambda bi, ki: (bi, 0)),          # idx
        ],
        out_specs=pl.BlockSpec((b_tile, NC_PAD), lambda bi, ki: (bi, 0)),
        scratch_shapes=[pltpu.VMEM((b_tile, D), jnp.float32)],
    )

    out = pl.pallas_call(
        tflinear_kernel,
        out_shape=jax.ShapeDtypeStruct((B_pad, NC_PAD), jnp.float32),
        grid_spec=grid_spec,
        compiler_params=pltpu.CompilerParams(
            dimension_semantics=("parallel", "arbitrary"),
            vmem_limit_bytes=vmem_limit),
    )(x2, prepped["wd_t"], prepped["bd"], prepped["gamma"], prepped["beta"],
      prepped["wsel_cat"], prepped["bsel_p"], idx2)

    return out[:B, :n_classes]


def tflinear_reference(x, idx, params):
    """Pure-JAX reference mirroring the PyTorch forward (f32, erf GELU)."""
    B = x.shape[0]
    x2 = x.reshape(B, -1).astype(jnp.float32)
    h = x2 @ params["wd"].T + params["bd"]
    h = 0.5 * h * (1.0 + jax.lax.erf(h * (1.0 / math.sqrt(2.0))))
    mean = h.mean(-1, keepdims=True)
    var = ((h - mean) ** 2).mean(-1, keepdims=True)
    h = (h - mean) / jnp.sqrt(var + 1e-5)
    h = h * params["gamma"] + params["beta"]
    w = params["wsel"][idx]                                    # (B, D, n_classes)
    return jnp.einsum("bd,bdc->bc", h, w) + params["bsel"][0][None, :]


if __name__ == "__main__":
    key = jax.random.PRNGKey(0)
    emb_size, seq_len, n_classes = 32, 8, 2
    B = 2

    kp, kx = jax.random.split(key)
    params = init_params(kp, emb_size, seq_len, n_classes)
    prepped = prepare_params(params, n_classes)     # one-time layout prep

    x = jax.random.normal(kx, (B, seq_len, emb_size), jnp.float32)
    true_false = jnp.array([0, 1], dtype=jnp.int32)

    ref = tflinear_reference(x, true_false, params)

    # 1) forced tk=128 with D=256 exercises the 2-step K accumulation pipeline
    out = tflinear_forward(x, true_false, prepped, tk=128)
    jax.block_until_ready(out)
    assert out.shape == (B, n_classes), out.shape
    # loose tolerance: kernel uses bf16 MXU inputs (f32 accumulation/epilogue)
    assert float(jnp.max(jnp.abs(out - ref))) < 0.1, float(jnp.max(jnp.abs(out - ref)))

    # 2) fully-automatic (generation-aware) tile selection path
    out_auto = tflinear_forward(x, true_false, prepped)
    jax.block_until_ready(out_auto)
    assert out_auto.shape == (B, n_classes), out_auto.shape
    assert float(jnp.max(jnp.abs(out_auto - ref))) < 0.1, \
        float(jnp.max(jnp.abs(out_auto - ref)))

    print("KERNEL_OK")
</pallas_src>

<mosaic_0001>
module attributes {stable_mosaic.version = 11 : i64} {
  func.func @tflinear_kernel(%arg0: i32, %arg1: i32, %arg2: memref<16x128xbf16, #tpu.memory_space<vmem>>, %arg3: memref<128x256xbf16, #tpu.memory_space<vmem>>, %arg4: memref<1x256xf32, #tpu.memory_space<vmem>>, %arg5: memref<1x256xf32, #tpu.memory_space<vmem>>, %arg6: memref<1x256xf32, #tpu.memory_space<vmem>>, %arg7: memref<256x256xbf16, #tpu.memory_space<vmem>>, %arg8: memref<1x128xf32, #tpu.memory_space<vmem>>, %arg9: memref<16x1xi32, #tpu.memory_space<vmem>>, %arg10: memref<16x128xf32, #tpu.memory_space<vmem>>, %arg11: memref<16x256xf32, #tpu.memory_space<vmem>>) attributes {dimension_semantics = [#tpu.dimension_semantics<parallel>, #tpu.dimension_semantics<arbitrary>], iteration_bounds = array<i64: 1, 2>, scalar_prefetch = 0 : i64, scratch_operands = 1 : i64, tpu.core_type = #tpu.core_type<tc>, window_params = [{transform_indices = @transform_0, window_bounds = array<i64: 16, 128>}, {transform_indices = @transform_1, window_bounds = array<i64: 128, 256>}, {pipeline_mode = #tpu.pipeline_mode<synchronous>, transform_indices = @transform_2, window_bounds = array<i64: 1, 256>}, {pipeline_mode = #tpu.pipeline_mode<synchronous>, transform_indices = @transform_3, window_bounds = array<i64: 1, 256>}, {pipeline_mode = #tpu.pipeline_mode<synchronous>, transform_indices = @transform_4, window_bounds = array<i64: 1, 256>}, {pipeline_mode = #tpu.pipeline_mode<synchronous>, transform_indices = @transform_5, window_bounds = array<i64: 256, 256>}, {pipeline_mode = #tpu.pipeline_mode<synchronous>, transform_indices = @transform_6, window_bounds = array<i64: 1, 128>}, {transform_indices = @transform_7, window_bounds = array<i64: 16, 1>}, {transform_indices = @transform_8, window_bounds = array<i64: 16, 128>}]} {
    %c0_i32 = arith.constant 0 : i32
    %0 = arith.cmpi eq, %arg1, %c0_i32 : i32
    %1 = arith.extui %0 : i1 to i32
    %c0_i32_0 = arith.constant 0 : i32
    %2 = arith.cmpi ne, %1, %c0_i32_0 : i32
    scf.if %2 {
      %cst_9 = arith.constant 0.000000e+00 : f32
      %12 = vector.broadcast %cst_9 : f32 to vector<16x256xf32>
      %c0_10 = arith.constant 0 : index
      %c0_11 = arith.constant 0 : index
      %13 = vector.load %arg11[%c0_10, %c0_11] : memref<16x256xf32, #tpu.memory_space<vmem>>, vector<16x256xf32>
      tpu.vector_store %arg11[%c0_10, %c0_11], %12 {strides = array<i32>} : memref<16x256xf32, #tpu.memory_space<vmem>>, vector<16x256xf32>,
    } else {
    }
    %c0 = arith.constant 0 : index
    %c0_1 = arith.constant 0 : index
    %3 = vector.load %arg11[%c0, %c0_1] : memref<16x256xf32, #tpu.memory_space<vmem>>, vector<16x256xf32>
    %c0_2 = arith.constant 0 : index
    %c0_3 = arith.constant 0 : index
    %4 = vector.load %arg2[%c0_2, %c0_3] : memref<16x128xbf16, #tpu.memory_space<vmem>>, vector<16x128xbf16>
    %c0_4 = arith.constant 0 : index
    %c0_5 = arith.constant 0 : index
    %5 = vector.load %arg3[%c0_4, %c0_5] : memref<128x256xbf16, #tpu.memory_space<vmem>>, vector<128x256xbf16>
    %cst = arith.constant dense<0.000000e+00> : vector<16x256xf32>
    %6 = tpu.matmul %4, %5, %cst {dimension_numbers = #tpu.dot_dimension_numbers<[1], [0], [0], [1], [0, 0, 1, 1], [], []>} : vector<16x128xbf16>, vector<128x256xbf16>, vector<16x256xf32> -> vector<16x256xf32>
    %7 = arith.addf %3, %6 : vector<16x256xf32>
    %c0_6 = arith.constant 0 : index
    %c0_7 = arith.constant 0 : index
    %8 = vector.load %arg11[%c0_6, %c0_7] : memref<16x256xf32, #tpu.memory_space<vmem>>, vector<16x256xf32>
    tpu.vector_store %arg11[%c0_6, %c0_7], %7 {strides = array<i32>} : memref<16x256xf32, #tpu.memory_space<vmem>>, vector<16x256xf32>,
    %c1_i32 = arith.constant 1 : i32
    %9 = arith.cmpi eq, %arg1, %c1_i32 : i32
    %10 = arith.extui %9 : i1 to i32
    %c0_i32_8 = arith.constant 0 : i32
    %11 = arith.cmpi ne, %10, %c0_i32_8 : i32
    scf.if %11 {
      %c0_9 = arith.constant 0 : index
      %c0_10 = arith.constant 0 : index
      %12 = vector.load %arg11[%c0_9, %c0_10] : memref<16x256xf32, #tpu.memory_space<vmem>>, vector<16x256xf32>
      %c0_11 = arith.constant 0 : index
      %c0_12 = arith.constant 0 : index
      %13 = vector.load %arg4[%c0_11, %c0_12] : memref<1x256xf32, #tpu.memory_space<vmem>>, vector<1x256xf32>
      %14 = vector.broadcast %13 : vector<1x256xf32> to vector<16x256xf32>
      %15 = arith.addf %12, %14 : vector<16x256xf32>
      %cst_13 = arith.constant 5.000000e-01 : f32
      %16 = vector.broadcast %cst_13 : f32 to vector<16x256xf32>
      %17 = arith.mulf %16, %15 : vector<16x256xf32>
      %cst_14 = arith.constant 0.707106769 : f32
      %18 = vector.broadcast %cst_14 : f32 to vector<16x256xf32>
      %19 = arith.mulf %15, %18 : vector<16x256xf32>
      %20 = math.erf %19 : vector<16x256xf32>
      %cst_15 = arith.constant 1.000000e+00 : f32
      %21 = vector.broadcast %cst_15 : f32 to vector<16x256xf32>
      %22 = arith.addf %21, %20 : vector<16x256xf32>
      %23 = arith.mulf %17, %22 : vector<16x256xf32>
      %cst_16 = arith.constant dense<0.000000e+00> : vector<16xf32>
      %24 = vector.multi_reduction <add>, %23, %cst_16 [1] : vector<16x256xf32> to vector<16xf32>
      %25 = vector.shape_cast %24 : vector<16xf32> to vector<16x1xf32>
      %cst_17 = arith.constant 2.560000e+02 : f32
      %26 = vector.broadcast %cst_17 : f32 to vector<16x1xf32>
      %27 = arith.divf %25, %26 : vector<16x1xf32>
      %28 = vector.broadcast %27 : vector<16x1xf32> to vector<16x256xf32>
      %29 = arith.subf %23, %28 : vector<16x256xf32>
      %30 = arith.mulf %29, %29 : vector<16x256xf32>
      %cst_18 = arith.constant dense<0.000000e+00> : vector<16xf32>
      %31 = vector.multi_reduction <add>, %30, %cst_18 [1] : vector<16x256xf32> to vector<16xf32>
      %32 = vector.shape_cast %31 : vector<16xf32> to vector<16x1xf32>
      %cst_19 = arith.constant 2.560000e+02 : f32
      %33 = vector.broadcast %cst_19 : f32 to vector<16x1xf32>
      %34 = arith.divf %32, %33 : vector<16x1xf32>
      %cst_20 = arith.constant 9.99999974E-6 : f32
      %35 = vector.broadcast %cst_20 : f32 to vector<16x1xf32>
      %36 = arith.addf %34, %35 : vector<16x1xf32>
      %37 = math.rsqrt %36 : vector<16x1xf32>
      %38 = vector.broadcast %37 : vector<16x1xf32> to vector<16x256xf32>
      %39 = arith.mulf %29, %38 : vector<16x256xf32>
      %c0_21 = arith.constant 0 : index
      %c0_22 = arith.constant 0 : index
      %40 = vector.load %arg5[%c0_21, %c0_22] : memref<1x256xf32, #tpu.memory_space<vmem>>, vector<1x256xf32>
      %41 = vector.broadcast %40 : vector<1x256xf32> to vector<16x256xf32>
      %42 = arith.mulf %39, %41 : vector<16x256xf32>
      %c0_23 = arith.constant 0 : index
      %c0_24 = arith.constant 0 : index
      %43 = vector.load %arg6[%c0_23, %c0_24] : memref<1x256xf32, #tpu.memory_space<vmem>>, vector<1x256xf32>
      %44 = vector.broadcast %43 : vector<1x256xf32> to vector<16x256xf32>
      %45 = arith.addf %42, %44 : vector<16x256xf32>
      %46 = arith.truncf %45 : vector<16x256xf32> to vector<16x256xbf16>
      %c0_25 = arith.constant 0 : index
      %c0_26 = arith.constant 0 : index
      %47 = vector.load %arg7[%c0_25, %c0_26] : memref<256x256xbf16, #tpu.memory_space<vmem>>, vector<256x256xbf16>
      %cst_27 = arith.constant dense<0.000000e+00> : vector<16x256xf32>
      %48 = tpu.matmul %46, %47, %cst_27 {dimension_numbers = #tpu.dot_dimension_numbers<[1], [0], [0], [1], [0, 0, 1, 1], [], []>} : vector<16x256xbf16>, vector<256x256xbf16>, vector<16x256xf32> -> vector<16x256xf32>
      %c0_28 = arith.constant 0 : index
      %c0_29 = arith.constant 0 : index
      %49 = vector.load %arg9[%c0_28, %c0_29] : memref<16x1xi32, #tpu.memory_space<vmem>>, vector<16x1xi32>
      %c0_i32_30 = arith.constant 0 : i32
      %50 = vector.broadcast %c0_i32_30 : i32 to vector<16x1xi32>
      %51 = arith.cmpi eq, %49, %50 : vector<16x1xi32>
      %52 = vector.extract_strided_slice %48 {offsets = [0, 0], sizes = [16, 128], strides = [1, 1]} : vector<16x256xf32> to vector<16x128xf32>
      %53 = vector.extract_strided_slice %48 {offsets = [0, 128], sizes = [16, 128], strides = [1, 1]} : vector<16x256xf32> to vector<16x128xf32>
      %54 = vector.shape_cast %51 : vector<16x1xi1> to vector<16x1xi1>
      %55 = vector.broadcast %54 : vector<16x1xi1> to vector<16x128xi1>
      %56 = arith.select %55, %52, %53 : vector<16x128xi1>, vector<16x128xf32>
      %c0_31 = arith.constant 0 : index
      %c0_32 = arith.constant 0 : index
      %57 = vector.load %arg8[%c0_31, %c0_32] : memref<1x128xf32, #tpu.memory_space<vmem>>, vector<1x128xf32>
      %58 = vector.broadcast %57 : vector<1x128xf32> to vector<16x128xf32>
      %59 = arith.addf %56, %58 : vector<16x128xf32>
      %c0_33 = arith.constant 0 : index
      %c0_34 = arith.constant 0 : index
      %60 = vector.load %arg10[%c0_33, %c0_34] : memref<16x128xf32, #tpu.memory_space<vmem>>, vector<16x128xf32>
      tpu.vector_store %arg10[%c0_33, %c0_34], %59 {strides = array<i32>} : memref<16x128xf32, #tpu.memory_space<vmem>>, vector<16x128xf32>,
    } else {
    }
    return
  }
  func.func @transform_0(%arg0: i32, %arg1: i32) -> (i32, i32) {
    %c0_i32 = arith.constant 0 : i32
    return %arg0, %arg1 : i32, i32
  }
  func.func @transform_1(%arg0: i32, %arg1: i32) -> (i32, i32) {
    %c0_i32 = arith.constant 0 : i32
    %c0_i32_0 = arith.constant 0 : i32
    return %arg1, %c0_i32 : i32, i32
  }
  func.func @transform_2(%arg0: i32, %arg1: i32) -> (i32, i32) {
    %c0_i32 = arith.constant 0 : i32
    %c0_i32_0 = arith.constant 0 : i32
    %c0_i32_1 = arith.constant 0 : i32
    return %c0_i32, %c0_i32_0 : i32, i32
  }
  func.func @transform_3(%arg0: i32, %arg1: i32) -> (i32, i32) {
    %c0_i32 = arith.constant 0 : i32
    %c0_i32_0 = arith.constant 0 : i32
    %c0_i32_1 = arith.constant 0 : i32
    return %c0_i32, %c0_i32_0 : i32, i32
  }
  func.func @transform_4(%arg0: i32, %arg1: i32) -> (i32, i32) {
    %c0_i32 = arith.constant 0 : i32
    %c0_i32_0 = arith.constant 0 : i32
    %c0_i32_1 = arith.constant 0 : i32
    return %c0_i32, %c0_i32_0 : i32, i32
  }
  func.func @transform_5(%arg0: i32, %arg1: i32) -> (i32, i32) {
    %c0_i32 = arith.constant 0 : i32
    %c0_i32_0 = arith.constant 0 : i32
    %c0_i32_1 = arith.constant 0 : i32
    return %c0_i32, %c0_i32_0 : i32, i32
  }
  func.func @transform_6(%arg0: i32, %arg1: i32) -> (i32, i32) {
    %c0_i32 = arith.constant 0 : i32
    %c0_i32_0 = arith.constant 0 : i32
    %c0_i32_1 = arith.constant 0 : i32
    return %c0_i32, %c0_i32_0 : i32, i32
  }
  func.func @transform_7(%arg0: i32, %arg1: i32) -> (i32, i32) {
    %c0_i32 = arith.constant 0 : i32
    %c0_i32_0 = arith.constant 0 : i32
    return %arg0, %c0_i32 : i32, i32
  }
  func.func @transform_8(%arg0: i32, %arg1: i32) -> (i32, i32) {
    %c0_i32 = arith.constant 0 : i32
    %c0_i32_0 = arith.constant 0 : i32
    return %arg0, %c0_i32 : i32, i32
  }
}

</mosaic_0001>

<llo_original>
// kernel: tpu_custom_call.1
$region0: #{tpu_custom_call.1}
  #allocation0 [shape = 'u32[]', space=smem, size = 0x4, offset = 0x4, fixed_abs, tag = 'smem constant byte address 0x4 - core index']
  #allocation1 [shape = 'u32[72,128]{1,0:T(1,128)}', space=vmem, size = 0x9000, scoped, tag = 'internal scratch']
  #allocation2 [shape = 'f32[16,256]{1,0:T(8,128)}', space=vmem, size = 0x4000, scoped, tag = 'scratch operand']
  %s0 = inlined_call_operand.vmem [shape: bf16[16,256], index: 0, kind: input, shape index: {}]
  %s1 = inlined_call_operand.hbm [shape: bf16[256,256], index: 1, kind: input, shape index: {}]
  %s2 = inlined_call_operand.hbm [shape: f32[1,256], index: 2, kind: input, shape index: {}]
  %s3 = inlined_call_operand.hbm [shape: f32[1,256], index: 3, kind: input, shape index: {}]
  %s4 = inlined_call_operand.vmem [shape: f32[1,256], index: 4, kind: input, shape index: {}]
  %s5 = inlined_call_operand.hbm [shape: bf16[256,256], index: 5, kind: input, shape index: {}]
  %s6 = inlined_call_operand.vmem [shape: f32[1,128], index: 6, kind: input, shape index: {}]
  %s7 = inlined_call_operand.vmem [shape: s32[16,1], index: 7, kind: input, shape index: {}]
  %s8 = inlined_call_operand.hbm [shape: f32[16,128], index: 8, kind: output, shape index: {}]
  %s9 = sld [smem:[#allocation0]]
  $region130: #{tpu_custom_call.1} parent=0
    _
  %s11 = ssub.s32 1, %s9
  %s12 = scalar_select 0, %s11, %s9
  $region1: #{tpu_custom_call.1} parent=0
    #allocation3 [shape = 'u8[8192]{0}', space=vmem, size = 0x2000, scoped, tag = 'input window, operand 0']
    #allocation4 [shape = 'u8[131072]{0}', space=vmem, size = 0x20000, scoped, tag = 'input window, operand 1']
    #allocation5 [shape = 's32[2]{0}', space=sflag, size = 0x8, scoped, tag = 'scoped memory for tpu_custom_call.1']
    #allocation6 [shape = 's32[2]{0}', space=sflag, size = 0x8, scoped, tag = 'scoped memory for tpu_custom_call.1']
    #allocation7 [shape = 'u8[1024]{0}', space=vmem, size = 0x400, scoped, tag = 'input window, operand 2, single buffered']
    #allocation8 [shape = 's32[1]{0}', space=sflag, size = 0x4, scoped, tag = 'scoped memory for tpu_custom_call.1']
    #allocation9 [shape = 'u8[1024]{0}', space=vmem, size = 0x400, scoped, tag = 'input window, operand 3, single buffered']
    #allocation10 [shape = 'u8[131072]{0}', space=vmem, size = 0x20000, scoped, tag = 'input window, operand 5, single buffered']
    #allocation11 [shape = 's32[1]{0}', space=sflag, size = 0x4, scoped, tag = 'scoped memory for tpu_custom_call.1']
    #allocation12 [shape = 'u8[8192]{0}', space=vmem, size = 0x2000, scoped, tag = 'output window, operand 0, single buffered']
    %13 = vsyncpa [#allocation5], 0
    %s14 = scalar_lea.sflag [#allocation5], 1
    %15 = vsyncpa %s14, 0
    %16 = vsyncpa [#allocation8], 0
    %17 = vsyncpa [#allocation11], 0
    %18 = vsyncpa [#allocation6], 0
    loop: start=0, step=1, limit=4
    $region2: #{tpu_custom_call.1} parent=1 // loop_pre_header
      _
    $region3: #{tpu_custom_call.1} parent=1 // loop_header
      %s20 = sphi 0, %s24
      %p21 = scmp.ge.s32.totalorder %s20, 4
      %s27 = sphi 0, %s39
      %s28 = sphi 0, %s35
      %s29 = sphi 0, %s27
      %s30 = sphi 0, %s28
      %s31 = sphi 0, %s29
      %s32 = sphi 0, %s30
      %s44 = sphi 0, %s46
      %s47 = sphi 0, %s44
      %s48 = sphi 0, %s47
      %s64 = sphi 0, %s48
      %s70 = sphi 0, %s72
      %s73 = sphi 0, %s70
      %s74 = sphi 0, %s73
      %s90 = sphi 0, %s74
      %s94 = sphi 0, %s94
      %s96 = sphi 0, %s94
      %s97 = sphi 0, %s96
      %s111 = sphi 0, %s97
      %s115 = sphi 0, %s115
      %s117 = sphi 0, %s115
      %s118 = sphi 0, %s117
      %s132 = sphi 0, %s118
      %s136 = sphi 0, %s136
      %s138 = sphi 0, %s136
      %s139 = sphi 0, %s138
      %s153 = sphi 0, %s139
      %s157 = sphi 0, %s157
      %s159 = sphi 0, %s157
      %s160 = sphi 0, %s159
      %s174 = sphi 0, %s160
      %s178 = sphi 0, %s178
      %s180 = sphi 0, %s178
      %s181 = sphi 0, %s180
      %s195 = sphi 0, %s181
      %s201 = sphi 0, %s203
      %s204 = sphi 0, %s201
      %s205 = sphi 0, %s204
      %s221 = sphi 0, %s205
      %s227 = sphi 0, %s229
      %s230 = sphi 0, %s227
      %s231 = sphi 0, %s230
      %s247 = sphi 0, %s231
    $region4: #{tpu_custom_call.1} parent=1 // loop_header_branch
      %23 = sbr.rel (%p21) target = $region8
    $region5: #{tpu_custom_call.1} parent=1 // loop_body
      %s25 = ssub.s32 %s20, 1
      %s26 = ssub.s32 %s20, 2
      %s33 = sadd.s32 1, %s28
      %p34 = scmp.ge.s32.totalorder %s33, 2
      %s35 = scalar_select %p34, 0, %s33
      %s36 = sadd.s32 1, %s27
      %s37 = scalar_select %p34, %s36, %s27
      %p38 = scmp.ge.s32.totalorder %s37, 1
      %s39 = scalar_select %p38, 0, %s37
      %s40 = ssub.s32 %s27, %s39
      %s41 = ssub.s32 %s28, %s35
      %s42 = sor.u32 %s40, %s41
      %p43 = scmp.eq.s32.totalorder %s42, 0
      %s45 = sadd.s32 %s44, 1
      %s46 = scalar_select %p43, %s44, %s45
      %p49 = pneg %p43
      %p50 = scmp.eq.s32.totalorder %s20, 1
      %p51 = por %p49, %p50
      %p52 = scmp.ne.s32.totalorder %s44, %s47
      %p53 = scmp.eq.s32.totalorder %s20, 0
      %p54 = por %p52, %p53
      %p55 = scmp.ne.s32.totalorder %s44, %s47
      %p56 = scmp.eq.s32.totalorder %s25, 1
      %p57 = por %p55, %p56
      %p58 = scmp.ne.s32.totalorder %s47, %s48
      %p59 = scmp.eq.s32.totalorder %s25, 0
      %p60 = por %p58, %p59
      %p61 = scmp.ne.s32.totalorder %s47, %s48
      %p62 = scmp.eq.s32.totalorder %s26, 1
      %p63 = por %p61, %p62
      %p65 = scmp.ne.s32.totalorder %s48, %s64
      %p66 = scmp.eq.s32.totalorder %s26, 0
      %p67 = por %p65, %p66
      %s68 = ssub.s32 %s28, %s35
      %p69 = scmp.eq.s32.totalorder %s68, 0
      %s71 = sadd.s32 %s70, 1
      %s72 = scalar_select %p69, %s70, %s71
      %p75 = pneg %p69
      %p76 = scmp.eq.s32.totalorder %s20, 1
      %p77 = por %p75, %p76
      %p78 = scmp.ne.s32.totalorder %s70, %s73
      %p79 = scmp.eq.s32.totalorder %s20, 0
      %p80 = por %p78, %p79
      %p81 = scmp.ne.s32.totalorder %s70, %s73
      %p82 = scmp.eq.s32.totalorder %s25, 1
      %p83 = por %p81, %p82
      %p84 = scmp.ne.s32.totalorder %s73, %s74
      %p85 = scmp.eq.s32.totalorder %s25, 0
      %p86 = por %p84, %p85
      %p87 = scmp.ne.s32.totalorder %s73, %s74
      %p88 = scmp.eq.s32.totalorder %s26, 1
      %p89 = por %p87, %p88
      %p91 = scmp.ne.s32.totalorder %s74, %s90
      %p92 = scmp.eq.s32.totalorder %s26, 0
      %p93 = por %p91, %p92
      %s95 = sadd.s32 %s94, 1
      %p98 = scmp.eq.s32.totalorder %s20, 1
      %p99 = scmp.ne.s32.totalorder %s94, %s96
      %p100 = scmp.eq.s32.totalorder %s20, 0
      %p101 = por %p99, %p100
      %p102 = scmp.ne.s32.totalorder %s94, %s96
      %p103 = scmp.eq.s32.totalorder %s25, 1
      %p104 = por %p102, %p103
      %p105 = scmp.ne.s32.totalorder %s96, %s97
      %p106 = scmp.eq.s32.totalorder %s25, 0
      %p107 = por %p105, %p106
      %p108 = scmp.ne.s32.totalorder %s96, %s97
      %p109 = scmp.eq.s32.totalorder %s26, 1
      %p110 = por %p108, %p109
      %p112 = scmp.ne.s32.totalorder %s97, %s111
      %p113 = scmp.eq.s32.totalorder %s26, 0
      %p114 = por %p112, %p113
      %s116 = sadd.s32 %s115, 1
      %p119 = scmp.eq.s32.totalorder %s20, 1
      %p120 = scmp.ne.s32.totalorder %s115, %s117
      %p121 = scmp.eq.s32.totalorder %s20, 0
      %p122 = por %p120, %p121
      %p123 = scmp.ne.s32.totalorder %s115, %s117
      %p124 = scmp.eq.s32.totalorder %s25, 1
      %p125 = por %p123, %p124
      %p126 = scmp.ne.s32.totalorder %s117, %s118
      %p127 = scmp.eq.s32.totalorder %s25, 0
      %p128 = por %p126, %p127
      %p129 = scmp.ne.s32.totalorder %s117, %s118
      %p130 = scmp.eq.s32.totalorder %s26, 1
      %p131 = por %p129, %p130
      %p133 = scmp.ne.s32.totalorder %s118, %s132
      %p134 = scmp.eq.s32.totalorder %s26, 0
      %p135 = por %p133, %p134
      %s137 = sadd.s32 %s136, 1
      %p140 = scmp.eq.s32.totalorder %s20, 1
      %p141 = scmp.ne.s32.totalorder %s136, %s138
      %p142 = scmp.eq.s32.totalorder %s20, 0
      %p143 = por %p141, %p142
      %p144 = scmp.ne.s32.totalorder %s136, %s138
      %p145 = scmp.eq.s32.totalorder %s25, 1
      %p146 = por %p144, %p145
      %p147 = scmp.ne.s32.totalorder %s138, %s139
      %p148 = scmp.eq.s32.totalorder %s25, 0
      %p149 = por %p147, %p148
      %p150 = scmp.ne.s32.totalorder %s138, %s139
      %p151 = scmp.eq.s32.totalorder %s26, 1
      %p152 = por %p150, %p151
      %p154 = scmp.ne.s32.totalorder %s139, %s153
      %p155 = scmp.eq.s32.totalorder %s26, 0
      %p156 = por %p154, %p155
      %s158 = sadd.s32 %s157, 1
      %p161 = scmp.eq.s32.totalorder %s20, 1
      %p162 = scmp.ne.s32.totalorder %s157, %s159
      %p163 = scmp.eq.s32.totalorder %s20, 0
      %p164 = por %p162, %p163
      %p165 = scmp.ne.s32.totalorder %s157, %s159
      %p166 = scmp.eq.s32.totalorder %s25, 1
      %p167 = por %p165, %p166
      %p168 = scmp.ne.s32.totalorder %s159, %s160
      %p169 = scmp.eq.s32.totalorder %s25, 0
      %p170 = por %p168, %p169
      %p171 = scmp.ne.s32.totalorder %s159, %s160
      %p172 = scmp.eq.s32.totalorder %s26, 1
      %p173 = por %p171, %p172
      %p175 = scmp.ne.s32.totalorder %s160, %s174
      %p176 = scmp.eq.s32.totalorder %s26, 0
      %p177 = por %p175, %p176
      %s179 = sadd.s32 %s178, 1
      %p182 = scmp.eq.s32.totalorder %s20, 1
      %p183 = scmp.ne.s32.totalorder %s178, %s180
      %p184 = scmp.eq.s32.totalorder %s20, 0
      %p185 = por %p183, %p184
      %p186 = scmp.ne.s32.totalorder %s178, %s180
      %p187 = scmp.eq.s32.totalorder %s25, 1
      %p188 = por %p186, %p187
      %p189 = scmp.ne.s32.totalorder %s180, %s181
      %p190 = scmp.eq.s32.totalorder %s25, 0
      %p191 = por %p189, %p190
      %p192 = scmp.ne.s32.totalorder %s180, %s181
      %p193 = scmp.eq.s32.totalorder %s26, 1
      %p194 = por %p192, %p193
      %p196 = scmp.ne.s32.totalorder %s181, %s195
      %p197 = scmp.eq.s32.totalorder %s26, 0
      %p198 = por %p196, %p197
      %s199 = ssub.s32 %s27, %s39
      %p200 = scmp.eq.s32.totalorder %s199, 0
      %s202 = sadd.s32 %s201, 1
      %s203 = scalar_select %p200, %s201, %s202
      %p206 = pneg %p200
      %p207 = scmp.eq.s32.totalorder %s20, 1
      %p208 = por %p206, %p207
      %p209 = scmp.ne.s32.totalorder %s201, %s204
      %p210 = scmp.eq.s32.totalorder %s20, 0
      %p211 = por %p209, %p210
      %p212 = scmp.ne.s32.totalorder %s201, %s204
      %p213 = scmp.eq.s32.totalorder %s25, 1
      %p214 = por %p212, %p213
      %p215 = scmp.ne.s32.totalorder %s204, %s205
      %p216 = scmp.eq.s32.totalorder %s25, 0
      %p217 = por %p215, %p216
      %p218 = scmp.ne.s32.totalorder %s204, %s205
      %p219 = scmp.eq.s32.totalorder %s26, 1
      %p220 = por %p218, %p219
      %p222 = scmp.ne.s32.totalorder %s205, %s221
      %p223 = scmp.eq.s32.totalorder %s26, 0
      %p224 = por %p222, %p223
      %s225 = ssub.s32 %s27, %s39
      %p226 = scmp.eq.s32.totalorder %s225, 0
      %s228 = sadd.s32 %s227, 1
      %s229 = scalar_select %p226, %s227, %s228
      %p232 = pneg %p226
      %p233 = scmp.eq.s32.totalorder %s20, 1
      %p234 = por %p232, %p233
      %p235 = scmp.ne.s32.totalorder %s227, %s230
      %p236 = scmp.eq.s32.totalorder %s20, 0
      %p237 = por %p235, %p236
      %p238 = scmp.ne.s32.totalorder %s227, %s230
      %p239 = scmp.eq.s32.totalorder %s25, 1
      %p240 = por %p238, %p239
      %p241 = scmp.ne.s32.totalorder %s230, %s231
      %p242 = scmp.eq.s32.totalorder %s25, 0
      %p243 = por %p241, %p242
      %p244 = scmp.ne.s32.totalorder %s230, %s231
      %p245 = scmp.eq.s32.totalorder %s26, 1
      %p246 = por %p244, %p245
      %p248 = scmp.ne.s32.totalorder %s231, %s247
      %p249 = scmp.eq.s32.totalorder %s26, 0
      %p250 = por %p248, %p249
      %p251 = scmp.le.s32.totalorder 1, %s20
      %p252 = scmp.lt.s32.totalorder %s20, 3
      %p253 = pnand %p251, %p252
      %p254 = pneg %p253
      // Predicated region
      $region9: #{tpu_custom_call.1} parent=5 // pred_check
        _
      $region10: #{tpu_custom_call.1} parent=5 // pred_check_branch
        %256 = sbr.rel (%p253) target = $region12
      $region11: #{tpu_custom_call.1} parent=5 // pred_region
        %s257 = ssub.s32 %s20, 1
        // Predicated region
        $region13: #{tpu_custom_call.1} parent=11 // pred_check
          %p258 = pneg %p107
        $region14: #{tpu_custom_call.1} parent=11 // pred_check_branch
          %260 = sbr.rel (%p258) target = $region16
        $region15: #{tpu_custom_call.1} parent=11 // pred_region
          %262 = vsyncadd [#allocation8], 0
          %s264 = sshll.u32 %s2, 4
          %s265 = int_to_ptr.hbm [resolvable:$true] %s264
          %s266 = sshll.u32 [#allocation7], 4
          %s267 = int_to_ptr.vmem [resolvable:$true] %s266
          %269 = dma.hbm_to_vmem [thread:$0]  %s265, 32, %s267, [#allocation8]
        $region16: #{tpu_custom_call.1} parent=11 // pred_fallthru
          _
        // Predicated region
        $region17: #{tpu_custom_call.1} parent=11 // pred_check
          %p270 = pneg %p128
        $region18: #{tpu_custom_call.1} parent=11 // pred_check_branch
          %272 = sbr.rel (%p270) target = $region20
        $region19: #{tpu_custom_call.1} parent=11 // pred_region
          %274 = vsyncadd [#allocation8], 0
          %s276 = sshll.u32 %s3, 4
          %s277 = int_to_ptr.hbm [resolvable:$true] %s276
          %s278 = sshll.u32 [#allocation9], 4
          %s279 = int_to_ptr.vmem [resolvable:$true] %s278
          %281 = dma.hbm_to_vmem [thread:$0]  %s277, 32, %s279, [#allocation8]
        $region20: #{tpu_custom_call.1} parent=11 // pred_fallthru
          _
        // Predicated region
        $region21: #{tpu_custom_call.1} parent=11 // pred_check
          %p282 = pneg %p149
        $region22: #{tpu_custom_call.1} parent=11 // pred_check_branch
          %284 = sbr.rel (%p282) target = $region24
        $region23: #{tpu_custom_call.1} parent=11 // pred_region
          _
        $region24: #{tpu_custom_call.1} parent=11 // pred_fallthru
          _
        // Predicated region
        $region25: #{tpu_custom_call.1} parent=11 // pred_check
          %p285 = pneg %p170
        $region26: #{tpu_custom_call.1} parent=11 // pred_check_branch
          %287 = sbr.rel (%p285) target = $region28
        $region27: #{tpu_custom_call.1} parent=11 // pred_region
          %289 = vsyncadd [#allocation11], 0
          %s290 = sshll.u32 %s5, 4
          %s291 = int_to_ptr.hbm [resolvable:$true] %s290
          %s292 = sshll.u32 [#allocation10], 4
          %s293 = int_to_ptr.vmem [resolvable:$true] %s292
          %298 = dma.hbm_to_vmem [thread:$0]  %s291, 4096, %s293, [#allocation11], 128, 128, 8
        $region28: #{tpu_custom_call.1} parent=11 // pred_fallthru
          _
        // Predicated region
        $region29: #{tpu_custom_call.1} parent=11 // pred_check
          %p299 = pneg %p191
        $region30: #{tpu_custom_call.1} parent=11 // pred_check_branch
          %301 = sbr.rel (%p299) target = $region32
        $region31: #{tpu_custom_call.1} parent=11 // pred_region
          _
        $region32: #{tpu_custom_call.1} parent=11 // pred_fallthru
          _
        // Predicated region
        $region33: #{tpu_custom_call.1} parent=11 // pred_check
          %p302 = pneg %p217
        $region34: #{tpu_custom_call.1} parent=11 // pred_check_branch
          %304 = sbr.rel (%p302) target = $region36
        $region35: #{tpu_custom_call.1} parent=11 // pred_region
          %s305 = smul.u32 2, %s29
          %p306 = scmp.lt.s32.totalorder %s305, 1
          %s307 = scalar_select %p306, %s305, 1
          %s308 = smul.addr %s307, 8
          %s309 = scalar_lea.vmem %s7, %s308
          %s310 = smul.u32 2, %s29
        $region36: #{tpu_custom_call.1} parent=11 // pred_fallthru
          _
      $region12: #{tpu_custom_call.1} parent=5 // pred_fallthru
        _
      %p311 = scmp.lt.s32.totalorder %s20, 2
      // Predicated region
      $region37: #{tpu_custom_call.1} parent=5 // pred_check
        %p312 = pneg %p311
      $region38: #{tpu_custom_call.1} parent=5 // pred_check_branch
        %314 = sbr.rel (%p312) target = $region40
      $region39: #{tpu_custom_call.1} parent=5 // pred_region
        // Predicated region
        $region41: #{tpu_custom_call.1} parent=39 // pred_check
          %p315 = pneg %p54
        $region42: #{tpu_custom_call.1} parent=39 // pred_check_branch
          %317 = sbr.rel (%p315) target = $region44
        $region43: #{tpu_custom_call.1} parent=39 // pred_region
          %s318 = sand.u32 %s44, 1
          %s319 = sand.u32 %s44, 1
          %s320 = smul.addr %s319, 8
          %s321 = scalar_lea.vmem [#allocation3], %s320
          %s322 = smul.u32 2, %s27
          %s323 = smul.addr %s322, 2
          %s324 = sadd.s32 %s28, %s323
          %s325 = smul.addr %s324, 4
          %s326 = scalar_lea.vmem %s0, %s325
          // Predicated region
          $region45: #{tpu_custom_call.1} parent=43 // pred_check
            _
          $region46: #{tpu_custom_call.1} parent=43 // pred_check_branch
            %328 = sbr.rel (0) target = $region48
          $region47: #{tpu_custom_call.1} parent=43 // pred_region
            // Predicated region
            $region49: #{tpu_custom_call.1} parent=47 // pred_check
              _
            $region50: #{tpu_custom_call.1} parent=47 // pred_check_branch
              %330 = sbr.rel target = $region52
            $region51: #{tpu_custom_call.1} parent=47 // pred_region
              // Predicated region
              $region64: #{tpu_custom_call.1} parent=51 // pred_check
                _
              $region65: #{tpu_custom_call.1} parent=51 // pred_check_branch
                %348 = sbr.rel (0) target = $region67
              $region66: #{tpu_custom_call.1} parent=51 // pred_region
                loop: start=0, step=1, limit=1
                $region68: #{tpu_custom_call.1} parent=66 // loop_pre_header
                  _
                $region69: #{tpu_custom_call.1} parent=66 // loop_header
                  %s350 = sphi 0, %s354
                  %p351 = scmp.ge.s32.totalorder %s350, 1
                  %s355 = sphi %s326, %s326
                  %s356 = sphi %s321, %s321
                $region70: #{tpu_custom_call.1} parent=66 // loop_header_branch
                  %353 = sbr.rel (%p351) target = $region74
                $region71: #{tpu_custom_call.1} parent=66 // loop_body
                  _
                $region72: #{tpu_custom_call.1} parent=66 // loop_footer
                  %s354 = sadd.s32 1, %s350
                $region73: #{tpu_custom_call.1} parent=66 // loop_footer_branch
                  %349 = sbr.rel target = $region69
                $region74: #{tpu_custom_call.1} parent=66 // loop_exit
                  _
                %s358 = ssub.s32 16, 1
                loop: start=0, step=1, limit=1
                $region75: #{tpu_custom_call.1} parent=66 // loop_pre_header
                  _
                $region76: #{tpu_custom_call.1} parent=66 // loop_header
                  %s360 = sphi 0, %s364
                  %p361 = scmp.ge.s32.totalorder %s360, 1
                  %s365 = sphi %s326, %s326
                  %s366 = sphi %s321, %s321
                $region77: #{tpu_custom_call.1} parent=66 // loop_header_branch
                  %363 = sbr.rel (%p361) target = $region81
                $region78: #{tpu_custom_call.1} parent=66 // loop_body
                  %v367 = vld [vmem:[%s365] sm:%s358]
                  %368 = vst [vmem:[%s366] sm:%s358] %v367
                  %v369 = vld [vmem:[%s365 + $0x8] sm:%s358]
                  %370 = vst [vmem:[%s366 + $0x4] sm:%s358] %v369
                $region79: #{tpu_custom_call.1} parent=66 // loop_footer
                  %s364 = sadd.s32 1, %s360
                $region80: #{tpu_custom_call.1} parent=66 // loop_footer_branch
                  %359 = sbr.rel target = $region76
                $region81: #{tpu_custom_call.1} parent=66 // loop_exit
                  _
              $region67: #{tpu_custom_call.1} parent=51 // pred_fallthru
                _
            $region52: #{tpu_custom_call.1} parent=47 // pred_fallthru
              _
            // Predicated region
            $region53: #{tpu_custom_call.1} parent=47 // pred_check
              _
            $region54: #{tpu_custom_call.1} parent=47 // pred_check_branch
              %332 = sbr.rel (0) target = $region56
            $region55: #{tpu_custom_call.1} parent=47 // pred_region
              %s334 = ssub.s32 16, 1
              loop: start=0, step=1, limit=1
              $region57: #{tpu_custom_call.1} parent=55 // loop_pre_header
                _
              $region58: #{tpu_custom_call.1} parent=55 // loop_header
                %s336 = sphi 0, %s340
                %p337 = scmp.ge.s32.totalorder %s336, 1
                %s341 = sphi %s326, %s326
                %s342 = sphi %s321, %s321
              $region59: #{tpu_custom_call.1} parent=55 // loop_header_branch
                %339 = sbr.rel (%p337) target = $region63
              $region60: #{tpu_custom_call.1} parent=55 // loop_body
                %v343 = vld [vmem:[%s341] sm:%s334]
                %344 = vst [vmem:[%s342] sm:%s334] %v343
                %v345 = vld [vmem:[%s341 + $0x8] sm:%s334]
                %346 = vst [vmem:[%s342 + $0x4] sm:%s334] %v345
              $region61: #{tpu_custom_call.1} parent=55 // loop_footer
                %s340 = sadd.s32 1, %s336
              $region62: #{tpu_custom_call.1} parent=55 // loop_footer_branch
                %335 = sbr.rel target = $region58
              $region63: #{tpu_custom_call.1} parent=55 // loop_exit
                _
            $region56: #{tpu_custom_call.1} parent=47 // pred_fallthru
              _
          $region48: #{tpu_custom_call.1} parent=43 // pred_fallthru
            _
          %371 = vnop
        $region44: #{tpu_custom_call.1} parent=39 // pred_fallthru
          _
        // Predicated region
        $region82: #{tpu_custom_call.1} parent=39 // pred_check
          %p372 = pneg %p80
        $region83: #{tpu_custom_call.1} parent=39 // pred_check_branch
          %374 = sbr.rel (%p372) target = $region85
        $region84: #{tpu_custom_call.1} parent=39 // pred_region
          %s375 = sand.u32 %s70, 1
          %s376 = scalar_lea.sflag [#allocation5], %s375
          %s377 = sand.u32 %s70, 1
          %s378 = smul.addr %s377, 128
          %s379 = scalar_lea.vmem [#allocation4], %s378
          %s380 = smul.u32 16, %s28
          %382 = vsyncadd %s376, 0
          %s383 = smul.addr %s380, 2
          %s384 = smul.addr %s383, 4
          %s385 = scalar_lea.hbm %s1, %s384
          %s386 = sshll.u32 %s385, 4
          %s387 = int_to_ptr.hbm [resolvable:$true] %s386
          %s388 = sshll.u32 %s379, 4
          %s389 = int_to_ptr.vmem [resolvable:$true] %s388
          %394 = dma.hbm_to_vmem [thread:$0]  %s387, 2048, %s389, %s376, 128, 128, 8
        $region85: #{tpu_custom_call.1} parent=39 // pred_fallthru
          _
      $region40: #{tpu_custom_call.1} parent=5 // pred_fallthru
        _
      %p395 = scmp.le.s32.totalorder 1, %s20
      %p396 = scmp.lt.s32.totalorder %s20, 3
      %p397 = pnand %p395, %p396
      %p398 = pneg %p397
      // Predicated region
      $region86: #{tpu_custom_call.1} parent=5 // pred_check
        _
      $region87: #{tpu_custom_call.1} parent=5 // pred_check_branch
        %400 = sbr.rel (%p397) target = $region89
      $region88: #{tpu_custom_call.1} parent=5 // pred_region
        %s401 = ssub.s32 %s20, 1
        %s402 = sand.u32 %s47, 1
        %s403 = sand.u32 %s47, 1
        %s404 = smul.addr %s403, 8
        %s405 = scalar_lea.vmem [#allocation3], %s404
        // Predicated region
        $region90: #{tpu_custom_call.1} parent=88 // pred_check
          %p406 = pneg %p60
        $region91: #{tpu_custom_call.1} parent=88 // pred_check_branch
          %408 = sbr.rel (%p406) target = $region93
        $region92: #{tpu_custom_call.1} parent=88 // pred_region
          _
        $region93: #{tpu_custom_call.1} parent=88 // pred_fallthru
          _
        %s409 = sand.u32 %s73, 1
        %s410 = scalar_lea.sflag [#allocation5], %s409
        %s411 = sand.u32 %s73, 1
        %s412 = smul.addr %s411, 128
        %s413 = scalar_lea.vmem [#allocation4], %s412
        // Predicated region
        $region94: #{tpu_custom_call.1} parent=88 // pred_check
          %p414 = pneg %p86
        $region95: #{tpu_custom_call.1} parent=88 // pred_check_branch
          %416 = sbr.rel (%p414) target = $region97
        $region96: #{tpu_custom_call.1} parent=88 // pred_region
          %418 = dma.done %s410, 2048
        $region97: #{tpu_custom_call.1} parent=88 // pred_fallthru
          _
        // Predicated region
        $region98: #{tpu_custom_call.1} parent=88 // pred_check
          %p419 = pneg %p107
        $region99: #{tpu_custom_call.1} parent=88 // pred_check_branch
          %421 = sbr.rel (%p419) target = $region101
        $region100: #{tpu_custom_call.1} parent=88 // pred_region
          %423 = dma.done [#allocation8], 32
        $region101: #{tpu_custom_call.1} parent=88 // pred_fallthru
          _
        // Predicated region
        $region102: #{tpu_custom_call.1} parent=88 // pred_check
          %p424 = pneg %p128
        $region103: #{tpu_custom_call.1} parent=88 // pred_check_branch
          %426 = sbr.rel (%p424) target = $region105
        $region104: #{tpu_custom_call.1} parent=88 // pred_region
          %428 = dma.done [#allocation8], 32
        $region105: #{tpu_custom_call.1} parent=88 // pred_fallthru
          _
        // Predicated region
        $region106: #{tpu_custom_call.1} parent=88 // pred_check
          %p429 = pneg %p170
        $region107: #{tpu_custom_call.1} parent=88 // pred_check_branch
          %431 = sbr.rel (%p429) target = $region109
        $region108: #{tpu_custom_call.1} parent=88 // pred_region
          %433 = dma.done [#allocation11], 4096
        $region109: #{tpu_custom_call.1} parent=88 // pred_fallthru
          _
        %s434 = sand.u32 %s47, 1
        %s435 = sand.u32 %s47, 1
        %s436 = smul.addr %s435, 8
        %s437 = scalar_lea.vmem [#allocation3], %s436
        %p438 = pneg %p60
        %p439 = pneg %p57
        %s440 = sand.u32 %s73, 1
        %s441 = scalar_lea.sflag [#allocation5], %s440
        %s442 = sand.u32 %s73, 1
        %s443 = smul.addr %s442, 128
        %s444 = scalar_lea.vmem [#allocation4], %s443
        %p445 = pneg %p86
        %p446 = pneg %p83
        %p447 = pneg %p107
        %p448 = pneg %p104
        %p449 = pneg %p128
        %p450 = pneg %p125
        %p451 = pneg %p149
        %p452 = pneg %p146
        %p453 = pneg %p170
        %p454 = pneg %p167
        %p455 = pneg %p191
        %p456 = pneg %p188
        %s457 = smul.u32 2, %s29
        %p458 = scmp.lt.s32.totalorder %s457, 1
        %s459 = scalar_select %p458, %s457, 1
        %s460 = smul.addr %s459, 8
        %s461 = scalar_lea.vmem %s7, %s460
        %p462 = pneg %p217
        %p463 = pneg %p214
        %p464 = pneg %p243
        %p465 = pneg %p240
        %s466 = smul.u32 2, %s29
        %s467 = smul.u32 16, %s30
        %s468 = smul.u32 2, %s29
        %p469 = scmp.lt.s32.totalorder %s468, 1
        %s470 = scalar_select %p469, %s468, 1
        %s471 = smul.addr %s470, 8
        %s472 = scalar_lea.vmem %s7, %s471
        %s473 = smul.u32 2, %s29
        %s474 = smul.u32 2, %s29
        %p475 = scmp.eq.s32.totalorder %s30, 0
        // Predicated region
        $region110: #{tpu_custom_call.1} parent=88 // pred_check
          %p476 = pneg %p475
        $region111: #{tpu_custom_call.1} parent=88 // pred_check_branch
          %478 = sbr.rel (%p476) target = $region113
        $region112: #{tpu_custom_call.1} parent=88 // pred_region
          %479 = vst [vmem:[#allocation2] sm:$0xff] 0.0
          %480 = vst [vmem:[#allocation2 + $0x8] sm:$0xff] 0.0
          %481 = vst [vmem:[#allocation2 + $0x10] sm:$0xff] 0.0
          %482 = vst [vmem:[#allocation2 + $0x18] sm:$0xff] 0.0
        $region113: #{tpu_custom_call.1} parent=88 // pred_fallthru
          _
        %v483 = vld [vmem:[#allocation2] sm:$0xff]
        %v484 = vld [vmem:[#allocation2 + $0x8] sm:$0xff]
        %v485 = vld [vmem:[#allocation2 + $0x10] sm:$0xff]
        %v486 = vld [vmem:[#allocation2 + $0x18] sm:$0xff]
        %v487 = vld [vmem:[%s405] sm:$0xf]
        %v488 = vld [vmem:[%s405 + $0x4] sm:$0xf]
        %v489 = vld [vmem:[%s413] sm:$0xff]
        %v490 = vld [vmem:[%s413 + $0x8] sm:$0xff]
        %v491 = vld [vmem:[%s413 + $0x10] sm:$0xff]
        %v492 = vld [vmem:[%s413 + $0x18] sm:$0xff]
        %v493 = vld [vmem:[%s413 + $0x20] sm:$0xff]
        %v494 = vld [vmem:[%s413 + $0x28] sm:$0xff]
        %v495 = vld [vmem:[%s413 + $0x30] sm:$0xff]
        %v496 = vld [vmem:[%s413 + $0x38] sm:$0xff]
        %v497 = vld [vmem:[%s413 + $0x40] sm:$0xff]
        %v498 = vld [vmem:[%s413 + $0x48] sm:$0xff]
        %v499 = vld [vmem:[%s413 + $0x50] sm:$0xff]
        %v500 = vld [vmem:[%s413 + $0x58] sm:$0xff]
        %v501 = vld [vmem:[%s413 + $0x60] sm:$0xff]
        %v502 = vld [vmem:[%s413 + $0x68] sm:$0xff]
        %v503 = vld [vmem:[%s413 + $0x70] sm:$0xff]
        %v504 = vld [vmem:[%s413 + $0x78] sm:$0xff]
        %v507 = vunpack.c.l.b16 %v487
        %v508 = vunpack.c.l.b16 %v488
        %v509 = vpack.c.b16 %v508, %v507
        %v527 = vunpack.c.l.b16 %v489
        %v528 = vunpack.c.h.b16 %v489
        %v529 = vunpack.c.l.b16 %v490
        %v530 = vunpack.c.h.b16 %v490
        %v531 = vunpack.c.l.b16 %v491
        %v532 = vunpack.c.h.b16 %v491
        %v533 = vunpack.c.l.b16 %v492
        %v534 = vunpack.c.h.b16 %v492
        %v535 = vunpack.c.l.b16 %v493
        %v536 = vunpack.c.h.b16 %v493
        %v537 = vunpack.c.l.b16 %v494
        %v538 = vunpack.c.h.b16 %v494
        %v539 = vunpack.c.l.b16 %v495
        %v540 = vunpack.c.h.b16 %v495
        %v541 = vunpack.c.l.b16 %v496
        %v542 = vunpack.c.h.b16 %v496
        %v543 = vunpack.c.l.b16 %v497
        %v544 = vunpack.c.h.b16 %v497
        %v545 = vunpack.c.l.b16 %v498
        %v546 = vunpack.c.h.b16 %v498
        %v547 = vunpack.c.l.b16 %v499
        %v548 = vunpack.c.h.b16 %v499
        %v549 = vunpack.c.l.b16 %v500
        %v550 = vunpack.c.h.b16 %v500
        %v551 = vunpack.c.l.b16 %v501
        %v552 = vunpack.c.h.b16 %v501
        %v553 = vunpack.c.l.b16 %v502
        %v554 = vunpack.c.h.b16 %v502
        %v555 = vunpack.c.l.b16 %v503
        %v556 = vunpack.c.h.b16 %v503
        %v557 = vunpack.c.l.b16 %v504
        %v558 = vunpack.c.h.b16 %v504
        %v559 = vpack.c.b16 %v529, %v527
        %v560 = vpack.c.b16 %v530, %v528
        %v561 = vpack.c.b16 %v533, %v531
        %v562 = vpack.c.b16 %v534, %v532
        %v563 = vpack.c.b16 %v537, %v535
        %v564 = vpack.c.b16 %v538, %v536
        %v565 = vpack.c.b16 %v541, %v539
        %v566 = vpack.c.b16 %v542, %v540
        %v567 = vpack.c.b16 %v545, %v543
        %v568 = vpack.c.b16 %v546, %v544
        %v569 = vpack.c.b16 %v549, %v547
        %v570 = vpack.c.b16 %v550, %v548
        %v571 = vpack.c.b16 %v553, %v551
        %v572 = vpack.c.b16 %v554, %v552
        %v573 = vpack.c.b16 %v557, %v555
        %v574 = vpack.c.b16 %v558, %v556
        %591 = vmatpush.bf16.msra.mxu0 %v573
        %592 = vmatpush.bf16.msra.mxu0 %v571
        %593 = vmatpush.bf16.msra.mxu0 %v569
        %594 = vmatpush.bf16.msra.mxu0 %v567
        %595 = vmatpush.bf16.msra.mxu0 %v565
        %596 = vmatpush.bf16.msra.mxu0 %v563
        %597 = vmatpush.bf16.msra.mxu0 %v561
        %598 = vmatpush.bf16.msra.mxu0 %v559
        %599 = vmatmul.bf16.gmra.mxu0 %v509
        %v600 = vpop.f32.mrf.mxu0
        %v601 = vadd.f32 0.0, %v600
        %v602 = vpop.f32.mrf.mxu0
        %v603 = vadd.f32 0.0, %v602
        %604 = vdwg.mxu0
        %605 = vmatpush.bf16.msra.mxu0 %v574
        %606 = vmatpush.bf16.msra.mxu0 %v572
        %607 = vmatpush.bf16.msra.mxu0 %v570
        %608 = vmatpush.bf16.msra.mxu0 %v568
        %609 = vmatpush.bf16.msra.mxu0 %v566
        %610 = vmatpush.bf16.msra.mxu0 %v564
        %611 = vmatpush.bf16.msra.mxu0 %v562
        %612 = vmatpush.bf16.msra.mxu0 %v560
        %613 = vmatmul.bf16.gmra.mxu0 %v509
        %v614 = vpop.f32.mrf.mxu0
        %v615 = vadd.f32 0.0, %v614
        %v616 = vpop.f32.mrf.mxu0
        %v617 = vadd.f32 0.0, %v616
        %618 = vdwg.mxu0
        %v619 = vadd.f32 %v483, %v601
        %v620 = vadd.f32 %v484, %v615
        %v621 = vadd.f32 %v485, %v603
        %v622 = vadd.f32 %v486, %v617
        %623 = vst [vmem:[#allocation2] sm:$0xff] %v619
        %624 = vst [vmem:[#allocation2 + $0x8] sm:$0xff] %v620
        %625 = vst [vmem:[#allocation2 + $0x10] sm:$0xff] %v621
        %626 = vst [vmem:[#allocation2 + $0x18] sm:$0xff] %v622
        %p627 = scmp.eq.s32.totalorder %s30, 1
        // Predicated region
        $region114: #{tpu_custom_call.1} parent=88 // pred_check
          %p628 = pneg %p627
        $region115: #{tpu_custom_call.1} parent=88 // pred_check_branch
          %630 = sbr.rel (%p628) target = $region117
        $region116: #{tpu_custom_call.1} parent=88 // pred_region
          %v631 = vld [vmem:[#allocation2] sm:$0xff]
          %v632 = vld [vmem:[#allocation2 + $0x8] sm:$0xff]
          %v633 = vld [vmem:[#allocation2 + $0x10] sm:$0xff]
          %v634 = vld [vmem:[#allocation2 + $0x18] sm:$0xff]
          %v635 = vld [vmem:[#allocation7] sm:$0x3]
          %v637 = vperm.slane %v635, 0
          %v638 = vperm.slane %v635, 1
          %v641 = vadd.f32 %v631, %v637
          %v642 = vadd.f32 %v632, %v638
          %v643 = vadd.f32 %v633, %v637
          %v644 = vadd.f32 %v634, %v638
          %v645 = vmul.f32 %v641, 0.5
          %v646 = vmul.f32 %v642, 0.5
          %v647 = vmul.f32 %v643, 0.5
          %v648 = vmul.f32 %v644, 0.5
          %v649 = vmul.f32 %v641, 0.70710677
          %v650 = vmul.f32 %v642, 0.70710677
          %v651 = vmul.f32 %v643, 0.70710677
          %v652 = vmul.f32 %v644, 0.70710677
          %v653 = vmul.f32 %v649, %v649
          %v654 = vmin.f32 16.0, %v653
          %v655 = vmul.f32 %v654, 2.1237322e-06
          %v656 = vadd.f32 %v655, 0.00028619796
          %v657 = vmul.f32 %v654, %v656
          %v658 = vadd.f32 %v657, 0.0036580483
          %v659 = vmul.f32 %v654, %v658
          %v660 = vadd.f32 %v659, 0.05243302
          %v661 = vmul.f32 %v654, %v660
          %v662 = vadd.f32 %v661, 0.18741608
          %v663 = vmul.f32 %v654, %v662
          %v664 = vadd.f32 %v663, 1.1283791
          %v665 = vmul.f32 %v649, %v664
          %v666 = vmul.f32 %v654, 3.8918573e-05
          %v667 = vadd.f32 %v666, 0.001143296
          %v668 = vmul.f32 %v654, %v667
          %v669 = vadd.f32 %v668, 0.014752088
          %v670 = vmul.f32 %v654, %v669
          %v671 = vadd.f32 %v670, 0.112945676
          %v672 = vmul.f32 %v654, %v671
          %v673 = vadd.f32 %v672, 0.4994258
          %v674 = vmul.f32 %v654, %v673
          %v675 = vadd.f32 %v674, 1.0
          %v676 = vrcp.pop %v675
          %v677 = vmul.f32 %v675, %v676
          %v678 = vsub.f32 1.0, %v677
          %v679 = vmul.f32 %v676, %v678
          %v680 = vadd.f32 %v676, %v679
          %vm681 = vweird.f32 %v675
          %vm682 = vweird.f32 %v676
          %vm683 = vmor %vm681, %vm682
          %v684 = vsel %vm683, %v676, %v680
          %v685 = vand.u32 2147483647, %v675
          %vm686 = vcmp.eq.f32.partialorder %v685, 8.507059e+37
          %v687 = vand.u32 %v675, 2147483648
          %v688 = vor.u32 1.1754944e-38, %v687
          %v689 = vsel %vm686, %v688, %v684
          %v690 = vmul.f32 %v665, %v689
          %v691 = vmin.f32 %v690, 1.0
          %v692 = vmax.f32 %v691, -1.0
          %v693 = vmul.f32 %v650, %v650
          %v694 = vmin.f32 16.0, %v693
          %v695 = vmul.f32 %v694, 2.1237322e-06
          %v696 = vadd.f32 %v695, 0.00028619796
          %v697 = vmul.f32 %v694, %v696
          %v698 = vadd.f32 %v697, 0.0036580483
          %v699 = vmul.f32 %v694, %v698
          %v700 = vadd.f32 %v699, 0.05243302
          %v701 = vmul.f32 %v694, %v700
          %v702 = vadd.f32 %v701, 0.18741608
          %v703 = vmul.f32 %v694, %v702
          %v704 = vadd.f32 %v703, 1.1283791
          %v705 = vmul.f32 %v650, %v704
          %v706 = vmul.f32 %v694, 3.8918573e-05
          %v707 = vadd.f32 %v706, 0.001143296
          %v708 = vmul.f32 %v694, %v707
          %v709 = vadd.f32 %v708, 0.014752088
          %v710 = vmul.f32 %v694, %v709
          %v711 = vadd.f32 %v710, 0.112945676
          %v712 = vmul.f32 %v694, %v711
          %v713 = vadd.f32 %v712, 0.4994258
          %v714 = vmul.f32 %v694, %v713
          %v715 = vadd.f32 %v714, 1.0
          %v716 = vrcp.pop %v715
          %v717 = vmul.f32 %v715, %v716
          %v718 = vsub.f32 1.0, %v717
          %v719 = vmul.f32 %v716, %v718
          %v720 = vadd.f32 %v716, %v719
          %vm721 = vweird.f32 %v715
          %vm722 = vweird.f32 %v716
          %vm723 = vmor %vm721, %vm722
          %v724 = vsel %vm723, %v716, %v720
          %v725 = vand.u32 2147483647, %v715
          %vm726 = vcmp.eq.f32.partialorder %v725, 8.507059e+37
          %v727 = vand.u32 %v715, 2147483648
          %v728 = vor.u32 1.1754944e-38, %v727
          %v729 = vsel %vm726, %v728, %v724
          %v730 = vmul.f32 %v705, %v729
          %v731 = vmin.f32 %v730, 1.0
          %v732 = vmax.f32 %v731, -1.0
          %v733 = vmul.f32 %v651, %v651
          %v734 = vmin.f32 16.0, %v733
          %v735 = vmul.f32 %v734, 2.1237322e-06
          %v736 = vadd.f32 %v735, 0.00028619796
          %v737 = vmul.f32 %v734, %v736
          %v738 = vadd.f32 %v737, 0.0036580483
          %v739 = vmul.f32 %v734, %v738
          %v740 = vadd.f32 %v739, 0.05243302
          %v741 = vmul.f32 %v734, %v740
          %v742 = vadd.f32 %v741, 0.18741608
          %v743 = vmul.f32 %v734, %v742
          %v744 = vadd.f32 %v743, 1.1283791
          %v745 = vmul.f32 %v651, %v744
          %v746 = vmul.f32 %v734, 3.8918573e-05
          %v747 = vadd.f32 %v746, 0.001143296
          %v748 = vmul.f32 %v734, %v747
          %v749 = vadd.f32 %v748, 0.014752088
          %v750 = vmul.f32 %v734, %v749
          %v751 = vadd.f32 %v750, 0.112945676
          %v752 = vmul.f32 %v734, %v751
          %v753 = vadd.f32 %v752, 0.4994258
          %v754 = vmul.f32 %v734, %v753
          %v755 = vadd.f32 %v754, 1.0
          %v756 = vrcp.pop %v755
          %v757 = vmul.f32 %v755, %v756
          %v758 = vsub.f32 1.0, %v757
          %v759 = vmul.f32 %v756, %v758
          %v760 = vadd.f32 %v756, %v759
          %vm761 = vweird.f32 %v755
          %vm762 = vweird.f32 %v756
          %vm763 = vmor %vm761, %vm762
          %v764 = vsel %vm763, %v756, %v760
          %v765 = vand.u32 2147483647, %v755
          %vm766 = vcmp.eq.f32.partialorder %v765, 8.507059e+37
          %v767 = vand.u32 %v755, 2147483648
          %v768 = vor.u32 1.1754944e-38, %v767
          %v769 = vsel %vm766, %v768, %v764
          %v770 = vmul.f32 %v745, %v769
          %v771 = vmin.f32 %v770, 1.0
          %v772 = vmax.f32 %v771, -1.0
          %v773 = vmul.f32 %v652, %v652
          %v774 = vmin.f32 16.0, %v773
          %v775 = vmul.f32 %v774, 2.1237322e-06
          %v776 = vadd.f32 %v775, 0.00028619796
          %v777 = vmul.f32 %v774, %v776
          %v778 = vadd.f32 %v777, 0.0036580483
          %v779 = vmul.f32 %v774, %v778
          %v780 = vadd.f32 %v779, 0.05243302
          %v781 = vmul.f32 %v774, %v780
          %v782 = vadd.f32 %v781, 0.18741608
          %v783 = vmul.f32 %v774, %v782
          %v784 = vadd.f32 %v783, 1.1283791
          %v785 = vmul.f32 %v652, %v784
          %v786 = vmul.f32 %v774, 3.8918573e-05
          %v787 = vadd.f32 %v786, 0.001143296
          %v788 = vmul.f32 %v774, %v787
          %v789 = vadd.f32 %v788, 0.014752088
          %v790 = vmul.f32 %v774, %v789
          %v791 = vadd.f32 %v790, 0.112945676
          %v792 = vmul.f32 %v774, %v791
          %v793 = vadd.f32 %v792, 0.4994258
          %v794 = vmul.f32 %v774, %v793
          %v795 = vadd.f32 %v794, 1.0
          %v796 = vrcp.pop %v795
          %v797 = vmul.f32 %v795, %v796
          %v798 = vsub.f32 1.0, %v797
          %v799 = vmul.f32 %v796, %v798
          %v800 = vadd.f32 %v796, %v799
          %vm801 = vweird.f32 %v795
          %vm802 = vweird.f32 %v796
          %vm803 = vmor %vm801, %vm802
          %v804 = vsel %vm803, %v796, %v800
          %v805 = vand.u32 2147483647, %v795
          %vm806 = vcmp.eq.f32.partialorder %v805, 8.507059e+37
          %v807 = vand.u32 %v795, 2147483648
          %v808 = vor.u32 1.1754944e-38, %v807
          %v809 = vsel %vm806, %v808, %v804
          %v810 = vmul.f32 %v785, %v809
          %v811 = vmin.f32 %v810, 1.0
          %v812 = vmax.f32 %v811, -1.0
          %v813 = vadd.f32 %v692, 1.0
          %v814 = vadd.f32 %v732, 1.0
          %v815 = vadd.f32 %v772, 1.0
          %v816 = vadd.f32 %v812, 1.0
          %v817 = vmul.f32 %v645, %v813
          %v818 = vmul.f32 %v646, %v814
          %v819 = vmul.f32 %v647, %v815
          %v820 = vmul.f32 %v648, %v816
          %v821 = vadd.f32 %v817, %v818
          %822 = vadd.xlane.f32.xlu0 %v821
          %v823 = vpop.xlane.xlu0 %822
          %v824 = vadd.f32 %v819, %v820
          %825 = vadd.xlane.f32.xlu0 %v824
          %v826 = vpop.xlane.xlu0 %825
          %v827 = vrcp.pop 256.0
          %v828 = vmul.f32 256.0, %v827
          %v829 = vsub.f32 1.0, %v828
          %v830 = vmul.f32 %v827, %v829
          %v831 = vadd.f32 %v827, %v830
          %vm832 = vweird.f32 %v827
          %v833 = vsel %vm832, %v827, %v831
          %v834 = vmul.f32 %v823, %v833
          %v835 = vmul.f32 %v826, %v833
          %v836 = vsub.f32 %v817, %v834
          %v837 = vsub.f32 %v818, %v834
          %v838 = vsub.f32 %v819, %v835
          %v839 = vsub.f32 %v820, %v835
          %v840 = vmul.f32 %v836, %v836
          %v841 = vmul.f32 %v837, %v837
          %v842 = vmul.f32 %v838, %v838
          %v843 = vmul.f32 %v839, %v839
          %v844 = vadd.f32 %v840, %v841
          %845 = vadd.xlane.f32.xlu0 %v844
          %v846 = vpop.xlane.xlu0 %845
          %v847 = vadd.f32 %v842, %v843
          %848 = vadd.xlane.f32.xlu0 %v847
          %v849 = vpop.xlane.xlu0 %848
          %v850 = vmul.f32 %v846, %v833
          %v851 = vmul.f32 %v849, %v833
          %v852 = vadd.f32 %v850, 1e-05
          %v853 = vadd.f32 %v851, 1e-05
          %v854 = vrsqrt.pop %v852
          %v855 = vmul.f32 %v854, %v852
          %v856 = vmul.f32 %v855, %v854
          %v857 = vmul.f32 0.5, %v856
          %v858 = vsub.f32 1.5, %v857
          %v859 = vmul.f32 %v854, %v858
          %vm860 = vweird.f32 %v852
          %vm861 = vweird.f32 %v854
          %vm862 = vmor %vm860, %vm861
          %v863 = vsel %vm862, %v854, %v859
          %v864 = vrsqrt.pop %v853
          %v865 = vmul.f32 %v864, %v853
          %v866 = vmul.f32 %v865, %v864
          %v867 = vmul.f32 0.5, %v866
          %v868 = vsub.f32 1.5, %v867
          %v869 = vmul.f32 %v864, %v868
          %vm870 = vweird.f32 %v853
          %vm871 = vweird.f32 %v864
          %vm872 = vmor %vm870, %vm871
          %v873 = vsel %vm872, %v864, %v869
          %v874 = vmul.f32 %v836, %v863
          %v875 = vmul.f32 %v837, %v863
          %v876 = vmul.f32 %v838, %v873
          %v877 = vmul.f32 %v839, %v873
          %v878 = vld [vmem:[#allocation9] sm:$0x3]
          %v880 = vperm.slane %v878, 0
          %v881 = vperm.slane %v878, 1
          %v884 = vmul.f32 %v874, %v880
          %v885 = vmul.f32 %v875, %v881
          %v886 = vmul.f32 %v876, %v880
          %v887 = vmul.f32 %v877, %v881
          %v888 = vld [vmem:[%s4] sm:$0x3]
          %v890 = vperm.slane %v888, 0
          %v891 = vperm.slane %v888, 1
          %v894 = vadd.f32 %v884, %v890
          %v895 = vadd.f32 %v885, %v891
          %v896 = vadd.f32 %v886, %v890
          %v897 = vadd.f32 %v887, %v891
          %v898 = vpack.c.bf16 %v896, %v894
          %v899 = vpack.c.bf16 %v897, %v895
          %v900 = vld [vmem:[#allocation10] sm:$0xff]
          %v901 = vld [vmem:[#allocation10 + $0x8] sm:$0xff]
          %v902 = vld [vmem:[#allocation10 + $0x10] sm:$0xff]
          %v903 = vld [vmem:[#allocation10 + $0x18] sm:$0xff]
          %v904 = vld [vmem:[#allocation10 + $0x20] sm:$0xff]
          %v905 = vld [vmem:[#allocation10 + $0x28] sm:$0xff]
          %v906 = vld [vmem:[#allocation10 + $0x30] sm:$0xff]
          %v907 = vld [vmem:[#allocation10 + $0x38] sm:$0xff]
          %v908 = vld [vmem:[#allocation10 + $0x40] sm:$0xff]
          %v909 = vld [vmem:[#allocation10 + $0x48] sm:$0xff]
          %v910 = vld [vmem:[#allocation10 + $0x50] sm:$0xff]
          %v911 = vld [vmem:[#allocation10 + $0x58] sm:$0xff]
          %v912 = vld [vmem:[#allocation10 + $0x60] sm:$0xff]
          %v913 = vld [vmem:[#allocation10 + $0x68] sm:$0xff]
          %v914 = vld [vmem:[#allocation10 + $0x70] sm:$0xff]
          %v915 = vld [vmem:[#allocation10 + $0x78] sm:$0xff]
          %v916 = vld [vmem:[#allocation10 + $0x80] sm:$0xff]
          %v917 = vld [vmem:[#allocation10 + $0x88] sm:$0xff]
          %v918 = vld [vmem:[#allocation10 + $0x90] sm:$0xff]
          %v919 = vld [vmem:[#allocation10 + $0x98] sm:$0xff]
          %v920 = vld [vmem:[#allocation10 + $0xa0] sm:$0xff]
          %v921 = vld [vmem:[#allocation10 + $0xa8] sm:$0xff]
          %v922 = vld [vmem:[#allocation10 + $0xb0] sm:$0xff]
          %v923 = vld [vmem:[#allocation10 + $0xb8] sm:$0xff]
          %v924 = vld [vmem:[#allocation10 + $0xc0] sm:$0xff]
          %v925 = vld [vmem:[#allocation10 + $0xc8] sm:$0xff]
          %v926 = vld [vmem:[#allocation10 + $0xd0] sm:$0xff]
          %v927 = vld [vmem:[#allocation10 + $0xd8] sm:$0xff]
          %v928 = vld [vmem:[#allocation10 + $0xe0] sm:$0xff]
          %v929 = vld [vmem:[#allocation10 + $0xe8] sm:$0xff]
          %v930 = vld [vmem:[#allocation10 + $0xf0] sm:$0xff]
          %v931 = vld [vmem:[#allocation10 + $0xf8] sm:$0xff]
          %v964 = vunpack.c.l.b16 %v900
          %v965 = vunpack.c.h.b16 %v900
          %v966 = vunpack.c.l.b16 %v901
          %v967 = vunpack.c.h.b16 %v901
          %v968 = vunpack.c.l.b16 %v902
          %v969 = vunpack.c.h.b16 %v902
          %v970 = vunpack.c.l.b16 %v903
          %v971 = vunpack.c.h.b16 %v903
          %v972 = vunpack.c.l.b16 %v904
          %v973 = vunpack.c.h.b16 %v904
          %v974 = vunpack.c.l.b16 %v905
          %v975 = vunpack.c.h.b16 %v905
          %v976 = vunpack.c.l.b16 %v906
          %v977 = vunpack.c.h.b16 %v906
          %v978 = vunpack.c.l.b16 %v907
          %v979 = vunpack.c.h.b16 %v907
          %v980 = vunpack.c.l.b16 %v908
          %v981 = vunpack.c.h.b16 %v908
          %v982 = vunpack.c.l.b16 %v909
          %v983 = vunpack.c.h.b16 %v909
          %v984 = vunpack.c.l.b16 %v910
          %v985 = vunpack.c.h.b16 %v910
          %v986 = vunpack.c.l.b16 %v911
          %v987 = vunpack.c.h.b16 %v911
          %v988 = vunpack.c.l.b16 %v912
          %v989 = vunpack.c.h.b16 %v912
          %v990 = vunpack.c.l.b16 %v913
          %v991 = vunpack.c.h.b16 %v913
          %v992 = vunpack.c.l.b16 %v914
          %v993 = vunpack.c.h.b16 %v914
          %v994 = vunpack.c.l.b16 %v915
          %v995 = vunpack.c.h.b16 %v915
          %v996 = vunpack.c.l.b16 %v916
          %v997 = vunpack.c.h.b16 %v916
          %v998 = vunpack.c.l.b16 %v917
          %v999 = vunpack.c.h.b16 %v917
          %v1000 = vunpack.c.l.b16 %v918
          %v1001 = vunpack.c.h.b16 %v918
          %v1002 = vunpack.c.l.b16 %v919
          %v1003 = vunpack.c.h.b16 %v919
          %v1004 = vunpack.c.l.b16 %v920
          %v1005 = vunpack.c.h.b16 %v920
          %v1006 = vunpack.c.l.b16 %v921
          %v1007 = vunpack.c.h.b16 %v921
          %v1008 = vunpack.c.l.b16 %v922
          %v1009 = vunpack.c.h.b16 %v922
          %v1010 = vunpack.c.l.b16 %v923
          %v1011 = vunpack.c.h.b16 %v923
          %v1012 = vunpack.c.l.b16 %v924
          %v1013 = vunpack.c.h.b16 %v924
          %v1014 = vunpack.c.l.b16 %v925
          %v1015 = vunpack.c.h.b16 %v925
          %v1016 = vunpack.c.l.b16 %v926
          %v1017 = vunpack.c.h.b16 %v926
          %v1018 = vunpack.c.l.b16 %v927
          %v1019 = vunpack.c.h.b16 %v927
          %v1020 = vunpack.c.l.b16 %v928
          %v1021 = vunpack.c.h.b16 %v928
          %v1022 = vunpack.c.l.b16 %v929
          %v1023 = vunpack.c.h.b16 %v929
          %v1024 = vunpack.c.l.b16 %v930
          %v1025 = vunpack.c.h.b16 %v930
          %v1026 = vunpack.c.l.b16 %v931
          %v1027 = vunpack.c.h.b16 %v931
          %v1028 = vpack.c.b16 %v966, %v964
          %v1029 = vpack.c.b16 %v967, %v965
          %v1030 = vpack.c.b16 %v970, %v968
          %v1031 = vpack.c.b16 %v971, %v969
          %v1032 = vpack.c.b16 %v974, %v972
          %v1033 = vpack.c.b16 %v975, %v973
          %v1034 = vpack.c.b16 %v978, %v976
          %v1035 = vpack.c.b16 %v979, %v977
          %v1036 = vpack.c.b16 %v982, %v980
          %v1037 = vpack.c.b16 %v983, %v981
          %v1038 = vpack.c.b16 %v986, %v984
          %v1039 = vpack.c.b16 %v987, %v985
          %v1040 = vpack.c.b16 %v990, %v988
          %v1041 = vpack.c.b16 %v991, %v989
          %v1042 = vpack.c.b16 %v994, %v992
          %v1043 = vpack.c.b16 %v995, %v993
          %v1044 = vpack.c.b16 %v998, %v996
          %v1045 = vpack.c.b16 %v999, %v997
          %v1046 = vpack.c.b16 %v1002, %v1000
          %v1047 = vpack.c.b16 %v1003, %v1001
          %v1048 = vpack.c.b16 %v1006, %v1004
          %v1049 = vpack.c.b16 %v1007, %v1005
          %v1050 = vpack.c.b16 %v1010, %v1008
          %v1051 = vpack.c.b16 %v1011, %v1009
          %v1052 = vpack.c.b16 %v1014, %v1012
          %v1053 = vpack.c.b16 %v1015, %v1013
          %v1054 = vpack.c.b16 %v1018, %v1016
          %v1055 = vpack.c.b16 %v1019, %v1017
          %v1056 = vpack.c.b16 %v1022, %v1020
          %v1057 = vpack.c.b16 %v1023, %v1021
          %v1058 = vpack.c.b16 %v1026, %v1024
          %v1059 = vpack.c.b16 %v1027, %v1025
          %1092 = vmatpush.bf16.msra.mxu0 %v1042
          %1093 = vmatpush.bf16.msra.mxu0 %v1040
          %1094 = vmatpush.bf16.msra.mxu0 %v1038
          %1095 = vmatpush.bf16.msra.mxu0 %v1036
          %1096 = vmatpush.bf16.msra.mxu0 %v1034
          %1097 = vmatpush.bf16.msra.mxu0 %v1032
          %1098 = vmatpush.bf16.msra.mxu0 %v1030
          %1099 = vmatpush.bf16.msra.mxu0 %v1028
          %1100 = vmatmul.bf16.gmra.mxu0 %v898
          %v1101 = vpop.f32.mrf.mxu0
          %v1102 = vadd.f32 0.0, %v1101
          %v1103 = vpop.f32.mrf.mxu0
          %v1104 = vadd.f32 0.0, %v1103
          %1105 = vdwg.mxu0
          %1106 = vmatpush.bf16.msra.mxu0 %v1058
          %1107 = vmatpush.bf16.msra.mxu0 %v1056
          %1108 = vmatpush.bf16.msra.mxu0 %v1054
          %1109 = vmatpush.bf16.msra.mxu0 %v1052
          %1110 = vmatpush.bf16.msra.mxu0 %v1050
          %1111 = vmatpush.bf16.msra.mxu0 %v1048
          %1112 = vmatpush.bf16.msra.mxu0 %v1046
          %1113 = vmatpush.bf16.msra.mxu0 %v1044
          %1114 = vmatmul.bf16.gmra.mxu0 %v899
          %v1115 = vpop.f32.mrf.mxu0
          %v1116 = vadd.f32 %v1102, %v1115
          %v1117 = vpop.f32.mrf.mxu0
          %v1118 = vadd.f32 %v1104, %v1117
          %1119 = vdwg.mxu0
          %1120 = vmatpush.bf16.msra.mxu0 %v1043
          %1121 = vmatpush.bf16.msra.mxu0 %v1041
          %1122 = vmatpush.bf16.msra.mxu0 %v1039
          %1123 = vmatpush.bf16.msra.mxu0 %v1037
          %1124 = vmatpush.bf16.msra.mxu0 %v1035
          %1125 = vmatpush.bf16.msra.mxu0 %v1033
          %1126 = vmatpush.bf16.msra.mxu0 %v1031
          %1127 = vmatpush.bf16.msra.mxu0 %v1029
          %1128 = vmatmul.bf16.gmra.mxu0 %v898
          %v1129 = vpop.f32.mrf.mxu0
          %v1130 = vadd.f32 0.0, %v1129
          %v1131 = vpop.f32.mrf.mxu0
          %v1132 = vadd.f32 0.0, %v1131
          %1133 = vdwg.mxu0
          %1134 = vmatpush.bf16.msra.mxu0 %v1059
          %1135 = vmatpush.bf16.msra.mxu0 %v1057
          %1136 = vmatpush.bf16.msra.mxu0 %v1055
          %1137 = vmatpush.bf16.msra.mxu0 %v1053
          %1138 = vmatpush.bf16.msra.mxu0 %v1051
          %1139 = vmatpush.bf16.msra.mxu0 %v1049
          %1140 = vmatpush.bf16.msra.mxu0 %v1047
          %1141 = vmatpush.bf16.msra.mxu0 %v1045
          %1142 = vmatmul.bf16.gmra.mxu0 %v899
          %v1143 = vpop.f32.mrf.mxu0
          %v1144 = vadd.f32 %v1130, %v1143
          %v1145 = vpop.f32.mrf.mxu0
          %v1146 = vadd.f32 %v1132, %v1145
          %1147 = vdwg.mxu0
          %v1148 = vld [vmem:[%s472] sm:$0xff]
          %v1149 = vld [vmem:[%s472 + $0x8] sm:$0xff]
          %vm1150 = vcmp.eq.s32.totalorder %v1148, 0
          %vm1151 = vcmp.eq.s32.totalorder %v1149, 0
          %v1152 = vsel %vm1150, 1, 0
          %v1153 = vsel %vm1151, 1, 0
          %1154 = vset.pattern.permute.xlu0 0
          %1155 = vperm.xlu0 %1154, %v1152
          %v1156 = vpop.permute.xlu0 %1155
          %1157 = vset.pattern.permute.xlu0 0
          %1158 = vperm.xlu0 %1157, %v1153
          %v1159 = vpop.permute.xlu0 %1158
          %vm1160 = vcmp.eq.s32.totalorder %v1156, 1
          %vm1161 = vcmp.eq.s32.totalorder %v1159, 1
          %v1162 = vsel %vm1160, %v1116, %v1144
          %v1163 = vsel %vm1161, %v1118, %v1146
          %v1164 = vld [vmem:[%s6] sm:$0x1]
          %v1166 = vperm.slane %v1164, 0
          %v1168 = vadd.f32 %v1162, %v1166
          %v1169 = vadd.f32 %v1163, %v1166
          %1170 = vst [vmem:[#allocation12] sm:$0xff] %v1168
          %1171 = vst [vmem:[#allocation12 + $0x8] sm:$0xff] %v1169
        $region117: #{tpu_custom_call.1} parent=88 // pred_fallthru
          _
        // Predicated region
        $region118: #{tpu_custom_call.1} parent=88 // pred_check
          %p1172 = pneg %p240
        $region119: #{tpu_custom_call.1} parent=88 // pred_check_branch
          %1174 = sbr.rel (%p1172) target = $region121
        $region120: #{tpu_custom_call.1} parent=88 // pred_region
          %s1175 = smul.u32 2, %s29
          %1177 = vsyncadd [#allocation6], 0
          %s1178 = smul.addr %s1175, 8
          %s1179 = scalar_lea.hbm %s8, %s1178
          %s1180 = sshll.u32 [#allocation12], 4
          %s1181 = int_to_ptr.vmem [resolvable:$true] %s1180
          %s1182 = sshll.u32 %s1179, 4
          %s1183 = int_to_ptr.hbm [resolvable:$true] %s1182
          %1188 = dma.vmem_to_hbm [thread:$0]  %s1181, 256, %s1183, [#allocation6], 128, 128, 8
        $region121: #{tpu_custom_call.1} parent=88 // pred_fallthru
          _
        // Predicated region
        $region122: #{tpu_custom_call.1} parent=88 // pred_check
          %p1189 = pneg %p240
        $region123: #{tpu_custom_call.1} parent=88 // pred_check_branch
          %1191 = sbr.rel (%p1189) target = $region125
        $region124: #{tpu_custom_call.1} parent=88 // pred_region
          %1193 = dma.done [#allocation6], 256
        $region125: #{tpu_custom_call.1} parent=88 // pred_fallthru
          _
      $region89: #{tpu_custom_call.1} parent=5 // pred_fallthru
        _
      %p1194 = scmp.le.s32.totalorder 2, %s20
      // Predicated region
      $region126: #{tpu_custom_call.1} parent=5 // pred_check
        %p1195 = pneg %p1194
      $region127: #{tpu_custom_call.1} parent=5 // pred_check_branch
        %1197 = sbr.rel (%p1195) target = $region129
      $region128: #{tpu_custom_call.1} parent=5 // pred_region
        %s1198 = ssub.s32 %s20, 2
      $region129: #{tpu_custom_call.1} parent=5 // pred_fallthru
        _
    $region6: #{tpu_custom_call.1} parent=1 // loop_footer
      %s24 = sadd.s32 1, %s20
    $region7: #{tpu_custom_call.1} parent=1 // loop_footer_branch
      %19 = sbr.rel target = $region3
    $region8: #{tpu_custom_call.1} parent=1 // loop_exit
      _
    %1199 = vsyncpa [#allocation5], 1
    %s1200 = scalar_lea.sflag [#allocation5], 1
    %1201 = vsyncpa %s1200, 1
    %1202 = vsyncpa [#allocation8], 1
    %1203 = vsyncpa [#allocation11], 1
    %1204 = vsyncpa [#allocation6], 1
    %s1205 = scalar_lea.sflag [#allocation6], 1
    %1206 = vsyncpa %s1205, 1

</llo_original>
